<compile_context>
chip_gen: v6e
topology: v6e:2x2x1
jax: 0.10.0
libtpu: 0.0.40
codegen_flags: <defaults>
</compile_context>

<pallas_src>
import functools

import jax
import jax.numpy as jnp
from jax.experimental import pallas as pl
from jax.experimental.pallas import tpu as pltpu


def _powerprop_conv_kernel(x_ref, wb_ref, b_ref, o_ref, *, Ho, K):
    """One batch element: lane-dense (Ho, Wo*Cout) output slab.

    x_ref:  (1, Hp, Wp*Cin)       zero-padded, channel-folded input rows
    wb_ref: (K, Wp*Cin, Wo*Cout)  banded (kw-shift-structured) reparam'd weight
    b_ref:  (1, Wo*Cout)          bias tiled across the output-width axis
    o_ref:  (1, Ho, Wo*Cout)      lane-dense output
    """
    x = x_ref[...]                                     # (1, Hp, Wp*Cin)
    acc = jnp.zeros(o_ref.shape[1:], jnp.float32)      # (Ho, Wo*Cout) f32
    # Static unroll over the K kernel rows: each tap row is one lane-dense
    # MXU matmul (contraction dim Wp*Cin), accumulated in f32.
    for kh in range(K):
        acc += jnp.dot(
            x[0, kh:kh + Ho, :],                       # (Ho, Wp*Cin)
            wb_ref[kh],                                # (Wp*Cin, Wo*Cout)
            preferred_element_type=jnp.float32,
        )
    acc += b_ref[...].astype(jnp.float32)              # broadcast (1, Wo*Cout)
    o_ref[...] = acc[None].astype(o_ref.dtype)         # unmasked lane-dense vst


def _reparam_weights(w, alpha):
    """weights = w * |w|**(alpha - 1) with cheap special cases (no pow/EUP)."""
    e = float(alpha) - 1.0
    if e == 0.0:
        return w
    if e == 1.0:                          # alpha == 2: just w * |w|
        return w * jnp.abs(w)
    if e > 0.0 and e == int(e):           # integer exponent: repeated multiplies
        return w * jnp.abs(w) ** int(e)
    # NOTE: for alpha < 1 this yields NaN at w == 0 (same as the PyTorch module).
    return w * jnp.power(jnp.abs(w), e)


def powerprop_conv(x_nchw, w_oihw, b, alpha, mask=None):
    """Forward of PowerPropConv: conv2d(x, w*|w|^(alpha-1), b, stride=1, padding=1)."""
    N, Cin, H, W = x_nchw.shape
    Cout, Cin_w, K, K2 = w_oihw.shape
    assert Cin == Cin_w and K == K2
    pad = 1                                   # the module hard-codes padding=1
    Hp, Wp = H + 2 * pad, W + 2 * pad         # padded spatial dims
    Ho, Wo = Hp - K + 1, Wp - K + 1           # conv output dims (== H, W for K=3)

    # ---- weight-side prep (tiny, done once; not per grid step) --------------
    w_eff = _reparam_weights(w_oihw.astype(jnp.float32), alpha)
    if mask is not None:
        w_eff = w_eff * mask
    w_hwio = jnp.transpose(w_eff, (2, 3, 1, 0))          # (K, K, Cin, Cout)
    # Banded weight: wb[kh, wi*Cin+ci, wo*Cout+co] = w_hwio[kh, wi-wo, ci, co]
    # for 0 <= wi-wo < K, else 0.  Baking the kw shift into the matmul makes
    # the kernel a plain (Ho, Wp*Cin) x (Wp*Cin, Wo*Cout) product per kh with a
    # lane-dense result.
    wi = jnp.arange(Wp)[:, None]
    wo = jnp.arange(Wo)[None, :]
    kw_off = wi - wo                                     # (Wp, Wo)
    valid = (kw_off >= 0) & (kw_off < K)
    blocks = w_hwio[:, jnp.clip(kw_off, 0, K - 1)]       # (K, Wp, Wo, Cin, Cout)
    blocks = jnp.where(valid[None, :, :, None, None], blocks, 0.0)
    wb = jnp.transpose(blocks, (0, 1, 3, 2, 4)).reshape(K, Wp * Cin, Wo * Cout)
    b_row = jnp.tile(b.astype(jnp.float32), Wo).reshape(1, Wo * Cout)

    # ---- data-side prep: NCHW -> padded, channel-folded rows ----------------
    # TODO(synk): if the surrounding model keeps activations in NHWC, the two
    # transposes (and ideally the jnp.pad halo) disappear from the HBM path.
    x_nhwc = jnp.transpose(x_nchw, (0, 2, 3, 1))
    x_pad = jnp.pad(x_nhwc, ((0, 0), (pad, pad), (pad, pad), (0, 0)))
    x_fold = x_pad.reshape(N, Hp, Wp * Cin).astype(jnp.float32)

    kernel = functools.partial(_powerprop_conv_kernel, Ho=Ho, K=K)
    out_fold = pl.pallas_call(
        kernel,
        out_shape=jax.ShapeDtypeStruct((N, Ho, Wo * Cout), x_nchw.dtype),
        grid_spec=pltpu.PrefetchScalarGridSpec(
            num_scalar_prefetch=0,
            grid=(N,),                                   # parallel over batch
            in_specs=[
                pl.BlockSpec((1, Hp, Wp * Cin), lambda n: (n, 0, 0)),
                # Same block every step -> weight stays resident in VMEM.
                pl.BlockSpec((K, Wp * Cin, Wo * Cout), lambda n: (0, 0, 0)),
                pl.BlockSpec((1, Wo * Cout), lambda n: (0, 0)),
            ],
            out_specs=pl.BlockSpec((1, Ho, Wo * Cout), lambda n: (n, 0, 0)),
        ),
        compiler_params=pltpu.CompilerParams(
            dimension_semantics=("parallel",)),
    )(x_fold, wb, b_row)

    # (N, Ho, Wo*Cout) -> (N, Cout, Ho, Wo) to match the PyTorch interface.
    return jnp.transpose(out_fold.reshape(N, Ho, Wo, Cout), (0, 3, 1, 2))


def _reference(x_nchw, w_oihw, b, alpha):
    """Pure-JAX reference (mirrors F.conv2d semantics)."""
    w_eff = w_oihw * jnp.power(jnp.abs(w_oihw), alpha - 1.0)
    out = jax.lax.conv_general_dilated(
        x_nchw, w_eff,
        window_strides=(1, 1),
        padding=((1, 1), (1, 1)),
        dimension_numbers=("NCHW", "OIHW", "NCHW"),
    )
    return out + b.reshape(1, -1, 1, 1)


if __name__ == "__main__":
    # Module hyperparameters (kernel_size=3 as in the module default).
    alpha = 2.0
    in_channels, out_channels, ksize = 4, 8, 3
    N, H, W = 2, 16, 16

    key = jax.random.PRNGKey(0)
    kx, kw, kb = jax.random.split(key, 3)
    # Deterministic parameter init (torch.empty is uninitialized, so any
    # deterministic init is acceptable).
    x = jax.random.normal(kx, (N, in_channels, H, W), dtype=jnp.float32)
    w = jax.random.normal(
        kw, (out_channels, in_channels, ksize, ksize), dtype=jnp.float32
    ) * 0.1
    b = jax.random.normal(kb, (out_channels,), dtype=jnp.float32) * 0.1

    out = jax.block_until_ready(powerprop_conv(x, w, b, alpha))
    ref = jax.block_until_ready(_reference(x, w, b, alpha))

    assert out.shape == (N, out_channels, H, W)
    assert jnp.allclose(out, ref, atol=1e-4, rtol=1e-4)

    print("KERNEL_OK")
</pallas_src>

<mosaic_0001>
module attributes {stable_mosaic.version = 11 : i64} {
  func.func @_powerprop_conv_kernel(%arg0: i32, %arg1: memref<1x18x72xf32, #tpu.memory_space<vmem>>, %arg2: memref<3x72x128xf32, #tpu.memory_space<vmem>>, %arg3: memref<1x128xf32, #tpu.memory_space<vmem>>, %arg4: memref<1x16x128xf32, #tpu.memory_space<vmem>>) attributes {dimension_semantics = [#tpu.dimension_semantics<parallel>], iteration_bounds = array<i64: 2>, scalar_prefetch = 0 : i64, scratch_operands = 0 : i64, tpu.core_type = #tpu.core_type<tc>, window_params = [{transform_indices = @transform_0, window_bounds = array<i64: 1, 18, 72>}, {pipeline_mode = #tpu.pipeline_mode<synchronous>, transform_indices = @transform_1, window_bounds = array<i64: 3, 72, 128>}, {pipeline_mode = #tpu.pipeline_mode<synchronous>, transform_indices = @transform_2, window_bounds = array<i64: 1, 128>}, {transform_indices = @transform_3, window_bounds = array<i64: 1, 16, 128>}]} {
    %c0 = arith.constant 0 : index
    %c0_0 = arith.constant 0 : index
    %c0_1 = arith.constant 0 : index
    %0 = vector.load %arg1[%c0, %c0_0, %c0_1] : memref<1x18x72xf32, #tpu.memory_space<vmem>>, vector<1x18x72xf32>
    %cst = arith.constant 0.000000e+00 : f32
    %1 = vector.broadcast %cst : f32 to vector<16x128xf32>
    %2 = vector.extract_strided_slice %0 {offsets = [0, 0, 0], sizes = [1, 16, 72], strides = [1, 1, 1]} : vector<1x18x72xf32> to vector<1x16x72xf32>
    %3 = vector.shape_cast %2 : vector<1x16x72xf32> to vector<16x72xf32>
    %c0_2 = arith.constant 0 : index
    %c0_3 = arith.constant 0 : index
    %c0_4 = arith.constant 0 : index
    %4 = vector.load %arg2[%c0_2, %c0_3, %c0_4] : memref<3x72x128xf32, #tpu.memory_space<vmem>>, vector<1x72x128xf32>
    %5 = vector.shape_cast %4 : vector<1x72x128xf32> to vector<72x128xf32>
    %cst_5 = arith.constant dense<0.000000e+00> : vector<16x128xf32>
    %6 = tpu.matmul %3, %5, %cst_5 {dimension_numbers = #tpu.dot_dimension_numbers<[1], [0], [0], [1], [0, 0, 1, 1], [], []>} : vector<16x72xf32>, vector<72x128xf32>, vector<16x128xf32> -> vector<16x128xf32>
    %7 = arith.addf %1, %6 : vector<16x128xf32>
    %8 = vector.extract_strided_slice %0 {offsets = [0, 1, 0], sizes = [1, 16, 72], strides = [1, 1, 1]} : vector<1x18x72xf32> to vector<1x16x72xf32>
    %9 = vector.shape_cast %8 : vector<1x16x72xf32> to vector<16x72xf32>
    %c1 = arith.constant 1 : index
    %c0_6 = arith.constant 0 : index
    %c0_7 = arith.constant 0 : index
    %10 = vector.load %arg2[%c1, %c0_6, %c0_7] : memref<3x72x128xf32, #tpu.memory_space<vmem>>, vector<1x72x128xf32>
    %11 = vector.shape_cast %10 : vector<1x72x128xf32> to vector<72x128xf32>
    %cst_8 = arith.constant dense<0.000000e+00> : vector<16x128xf32>
    %12 = tpu.matmul %9, %11, %cst_8 {dimension_numbers = #tpu.dot_dimension_numbers<[1], [0], [0], [1], [0, 0, 1, 1], [], []>} : vector<16x72xf32>, vector<72x128xf32>, vector<16x128xf32> -> vector<16x128xf32>
    %13 = arith.addf %7, %12 : vector<16x128xf32>
    %14 = vector.extract_strided_slice %0 {offsets = [0, 2, 0], sizes = [1, 16, 72], strides = [1, 1, 1]} : vector<1x18x72xf32> to vector<1x16x72xf32>
    %15 = vector.shape_cast %14 : vector<1x16x72xf32> to vector<16x72xf32>
    %c2 = arith.constant 2 : index
    %c0_9 = arith.constant 0 : index
    %c0_10 = arith.constant 0 : index
    %16 = vector.load %arg2[%c2, %c0_9, %c0_10] : memref<3x72x128xf32, #tpu.memory_space<vmem>>, vector<1x72x128xf32>
    %17 = vector.shape_cast %16 : vector<1x72x128xf32> to vector<72x128xf32>
    %cst_11 = arith.constant dense<0.000000e+00> : vector<16x128xf32>
    %18 = tpu.matmul %15, %17, %cst_11 {dimension_numbers = #tpu.dot_dimension_numbers<[1], [0], [0], [1], [0, 0, 1, 1], [], []>} : vector<16x72xf32>, vector<72x128xf32>, vector<16x128xf32> -> vector<16x128xf32>
    %19 = arith.addf %13, %18 : vector<16x128xf32>
    %c0_12 = arith.constant 0 : index
    %c0_13 = arith.constant 0 : index
    %20 = vector.load %arg3[%c0_12, %c0_13] : memref<1x128xf32, #tpu.memory_space<vmem>>, vector<1x128xf32>
    %21 = vector.broadcast %20 : vector<1x128xf32> to vector<16x128xf32>
    %22 = arith.addf %19, %21 : vector<16x128xf32>
    %23 = vector.shape_cast %22 : vector<16x128xf32> to vector<1x16x128xf32>
    %c0_14 = arith.constant 0 : index
    %c0_15 = arith.constant 0 : index
    %c0_16 = arith.constant 0 : index
    %24 = vector.load %arg4[%c0_14, %c0_15, %c0_16] : memref<1x16x128xf32, #tpu.memory_space<vmem>>, vector<1x16x128xf32>
    tpu.vector_store %arg4[%c0_14, %c0_15, %c0_16], %23 {strides = array<i32>} : memref<1x16x128xf32, #tpu.memory_space<vmem>>, vector<1x16x128xf32>,
    return
  }
  func.func @transform_0(%arg0: i32) -> (i32, i32, i32) {
    %c0_i32 = arith.constant 0 : i32
    %c0_i32_0 = arith.constant 0 : i32
    %c0_i32_1 = arith.constant 0 : i32
    return %arg0, %c0_i32, %c0_i32_0 : i32, i32, i32
  }
  func.func @transform_1(%arg0: i32) -> (i32, i32, i32) {
    %c0_i32 = arith.constant 0 : i32
    %c0_i32_0 = arith.constant 0 : i32
    %c0_i32_1 = arith.constant 0 : i32
    %c0_i32_2 = arith.constant 0 : i32
    return %c0_i32, %c0_i32_0, %c0_i32_1 : i32, i32, i32
  }
  func.func @transform_2(%arg0: i32) -> (i32, i32) {
    %c0_i32 = arith.constant 0 : i32
    %c0_i32_0 = arith.constant 0 : i32
    %c0_i32_1 = arith.constant 0 : i32
    return %c0_i32, %c0_i32_0 : i32, i32
  }
  func.func @transform_3(%arg0: i32) -> (i32, i32, i32) {
    %c0_i32 = arith.constant 0 : i32
    %c0_i32_0 = arith.constant 0 : i32
    %c0_i32_1 = arith.constant 0 : i32
    return %arg0, %c0_i32, %c0_i32_0 : i32, i32, i32
  }
}

</mosaic_0001>

<llo_original>
// kernel: tpu_custom_call.1
$region0: #{tpu_custom_call.1}
  #allocation0 [shape = 'u32[]', space=smem, size = 0x4, offset = 0x4, fixed_abs, tag = 'smem constant byte address 0x4 - core index']
  #allocation1 [shape = 'u32[144,128]{1,0:T(1,128)}', space=vmem, size = 0x12000, scoped, tag = 'internal scratch']
  %s0 = inlined_call_operand.vmem [shape: f32[2,18,72], index: 0, kind: input, shape index: {}]
  %s1 = inlined_call_operand.hbm [shape: f32[3,72,128], index: 1, kind: input, shape index: {}]
  %s2 = inlined_call_operand.vmem [shape: f32[1,128], index: 2, kind: input, shape index: {}]
  %s3 = inlined_call_operand.hbm [shape: f32[2,16,128], index: 3, kind: output, shape index: {}]
  %s4 = sld [smem:[#allocation0]]
  $region49: #{tpu_custom_call.1} parent=0
    _
  %s6 = ssub.s32 1, %s4
  %s7 = scalar_select 0, %s6, %s4
  $region1: #{tpu_custom_call.1} parent=0
    #allocation2 [shape = 'u8[110592]{0}', space=vmem, size = 0x1b000, scoped, tag = 'input window, operand 1, single buffered']
    #allocation3 [shape = 's32[2]{0}', space=sflag, size = 0x8, scoped, tag = 'scoped memory for tpu_custom_call.1']
    #allocation4 [shape = 's32[2]{0}', space=sflag, size = 0x8, scoped, tag = 'scoped memory for tpu_custom_call.1']
    #allocation5 [shape = 'u8[16384]{0}', space=vmem, size = 0x4000, scoped, tag = 'output window, operand 0']
    %8 = vsyncpa [#allocation3], 0
    %9 = vsyncpa [#allocation4], 0
    %s10 = scalar_lea.sflag [#allocation4], 1
    %11 = vsyncpa %s10, 0
    loop: start=0, step=1, limit=4
    $region2: #{tpu_custom_call.1} parent=1 // loop_pre_header
      _
    $region3: #{tpu_custom_call.1} parent=1 // loop_header
      %s13 = sphi 0, %s17
      %p14 = scmp.ge.s32.totalorder %s13, 4
      %s23 = sphi 0, %s25
      %s26 = sphi 0, %s23
      %s27 = sphi 0, %s26
      %s43 = sphi 0, %s27
      %s47 = sphi 0, %s47
      %s49 = sphi 0, %s47
      %s50 = sphi 0, %s49
      %s64 = sphi 0, %s50
      %s68 = sphi 0, %s68
      %s70 = sphi 0, %s68
      %s71 = sphi 0, %s70
      %s85 = sphi 0, %s71
      %s91 = sphi 0, %s93
      %s94 = sphi 0, %s91
      %s95 = sphi 0, %s94
      %s111 = sphi 0, %s95
    $region4: #{tpu_custom_call.1} parent=1 // loop_header_branch
      %16 = sbr.rel (%p14) target = $region8
    $region5: #{tpu_custom_call.1} parent=1 // loop_body
      %s18 = ssub.s32 %s13, 1
      %s19 = ssub.s32 %s13, 2
      %s20 = sadd.s32 %s13, 1
      %s21 = ssub.s32 %s13, %s20
      %p22 = scmp.eq.s32.totalorder %s21, 0
      %s24 = sadd.s32 %s23, 1
      %s25 = scalar_select %p22, %s23, %s24
      %p28 = pneg %p22
      %p29 = scmp.eq.s32.totalorder %s13, 1
      %p30 = por %p28, %p29
      %p31 = scmp.ne.s32.totalorder %s23, %s26
      %p32 = scmp.eq.s32.totalorder %s13, 0
      %p33 = por %p31, %p32
      %p34 = scmp.ne.s32.totalorder %s23, %s26
      %p35 = scmp.eq.s32.totalorder %s18, 1
      %p36 = por %p34, %p35
      %p37 = scmp.ne.s32.totalorder %s26, %s27
      %p38 = scmp.eq.s32.totalorder %s18, 0
      %p39 = por %p37, %p38
      %p40 = scmp.ne.s32.totalorder %s26, %s27
      %p41 = scmp.eq.s32.totalorder %s19, 1
      %p42 = por %p40, %p41
      %p44 = scmp.ne.s32.totalorder %s27, %s43
      %p45 = scmp.eq.s32.totalorder %s19, 0
      %p46 = por %p44, %p45
      %s48 = sadd.s32 %s47, 1
      %p51 = scmp.eq.s32.totalorder %s13, 1
      %p52 = scmp.ne.s32.totalorder %s47, %s49
      %p53 = scmp.eq.s32.totalorder %s13, 0
      %p54 = por %p52, %p53
      %p55 = scmp.ne.s32.totalorder %s47, %s49
      %p56 = scmp.eq.s32.totalorder %s18, 1
      %p57 = por %p55, %p56
      %p58 = scmp.ne.s32.totalorder %s49, %s50
      %p59 = scmp.eq.s32.totalorder %s18, 0
      %p60 = por %p58, %p59
      %p61 = scmp.ne.s32.totalorder %s49, %s50
      %p62 = scmp.eq.s32.totalorder %s19, 1
      %p63 = por %p61, %p62
      %p65 = scmp.ne.s32.totalorder %s50, %s64
      %p66 = scmp.eq.s32.totalorder %s19, 0
      %p67 = por %p65, %p66
      %s69 = sadd.s32 %s68, 1
      %p72 = scmp.eq.s32.totalorder %s13, 1
      %p73 = scmp.ne.s32.totalorder %s68, %s70
      %p74 = scmp.eq.s32.totalorder %s13, 0
      %p75 = por %p73, %p74
      %p76 = scmp.ne.s32.totalorder %s68, %s70
      %p77 = scmp.eq.s32.totalorder %s18, 1
      %p78 = por %p76, %p77
      %p79 = scmp.ne.s32.totalorder %s70, %s71
      %p80 = scmp.eq.s32.totalorder %s18, 0
      %p81 = por %p79, %p80
      %p82 = scmp.ne.s32.totalorder %s70, %s71
      %p83 = scmp.eq.s32.totalorder %s19, 1
      %p84 = por %p82, %p83
      %p86 = scmp.ne.s32.totalorder %s71, %s85
      %p87 = scmp.eq.s32.totalorder %s19, 0
      %p88 = por %p86, %p87
      %s89 = ssub.s32 %s13, %s20
      %p90 = scmp.eq.s32.totalorder %s89, 0
      %s92 = sadd.s32 %s91, 1
      %s93 = scalar_select %p90, %s91, %s92
      %p96 = pneg %p90
      %p97 = scmp.eq.s32.totalorder %s13, 1
      %p98 = por %p96, %p97
      %p99 = scmp.ne.s32.totalorder %s91, %s94
      %p100 = scmp.eq.s32.totalorder %s13, 0
      %p101 = por %p99, %p100
      %p102 = scmp.ne.s32.totalorder %s91, %s94
      %p103 = scmp.eq.s32.totalorder %s18, 1
      %p104 = por %p102, %p103
      %p105 = scmp.ne.s32.totalorder %s94, %s95
      %p106 = scmp.eq.s32.totalorder %s18, 0
      %p107 = por %p105, %p106
      %p108 = scmp.ne.s32.totalorder %s94, %s95
      %p109 = scmp.eq.s32.totalorder %s19, 1
      %p110 = por %p108, %p109
      %p112 = scmp.ne.s32.totalorder %s95, %s111
      %p113 = scmp.eq.s32.totalorder %s19, 0
      %p114 = por %p112, %p113
      %p115 = scmp.le.s32.totalorder 1, %s13
      %p116 = scmp.lt.s32.totalorder %s13, 3
      %p117 = pnand %p115, %p116
      %p118 = pneg %p117
      // Predicated region
      $region9: #{tpu_custom_call.1} parent=5 // pred_check
        _
      $region10: #{tpu_custom_call.1} parent=5 // pred_check_branch
        %120 = sbr.rel (%p117) target = $region12
      $region11: #{tpu_custom_call.1} parent=5 // pred_region
        %s121 = ssub.s32 %s13, 1
        // Predicated region
        $region13: #{tpu_custom_call.1} parent=11 // pred_check
          %p122 = pneg %p60
        $region14: #{tpu_custom_call.1} parent=11 // pred_check_branch
          %124 = sbr.rel (%p122) target = $region16
        $region15: #{tpu_custom_call.1} parent=11 // pred_region
          %s126 = ssub.s32 3456, 3456
          %127 = vsyncadd [#allocation3], %s126
          %s128 = sshll.u32 [#allocation2], 4
          %s129 = int_to_ptr.vmem [resolvable:$true] %s128
          %134 = dma.hbm_to_vmem [thread:$0]  %s1, 3456, %s129, [#allocation3], 128, 128, 8
        $region16: #{tpu_custom_call.1} parent=11 // pred_fallthru
          _
        // Predicated region
        $region17: #{tpu_custom_call.1} parent=11 // pred_check
          %p135 = pneg %p81
        $region18: #{tpu_custom_call.1} parent=11 // pred_check_branch
          %137 = sbr.rel (%p135) target = $region20
        $region19: #{tpu_custom_call.1} parent=11 // pred_region
          _
        $region20: #{tpu_custom_call.1} parent=11 // pred_fallthru
          _
      $region12: #{tpu_custom_call.1} parent=5 // pred_fallthru
        _
      %p138 = scmp.lt.s32.totalorder %s13, 2
      // Predicated region
      $region21: #{tpu_custom_call.1} parent=5 // pred_check
        %p139 = pneg %p138
      $region22: #{tpu_custom_call.1} parent=5 // pred_check_branch
        %141 = sbr.rel (%p139) target = $region24
      $region23: #{tpu_custom_call.1} parent=5 // pred_region
        // Predicated region
        $region25: #{tpu_custom_call.1} parent=23 // pred_check
          %p142 = pneg %p33
        $region26: #{tpu_custom_call.1} parent=23 // pred_check_branch
          %144 = sbr.rel (%p142) target = $region28
        $region27: #{tpu_custom_call.1} parent=23 // pred_region
          %p145 = scmp.lt.s32.totalorder %s13, 1
          %s146 = scalar_select %p145, %s13, 1
          %s147 = smul.addr %s146, 3
          %s148 = smul.addr %s147, 8
          %s149 = scalar_lea.vmem %s0, %s148
        $region28: #{tpu_custom_call.1} parent=23 // pred_fallthru
          _
      $region24: #{tpu_custom_call.1} parent=5 // pred_fallthru
        _
      %p150 = scmp.le.s32.totalorder 1, %s13
      %p151 = scmp.lt.s32.totalorder %s13, 3
      %p152 = pnand %p150, %p151
      %p153 = pneg %p152
      // Predicated region
      $region29: #{tpu_custom_call.1} parent=5 // pred_check
        _
      $region30: #{tpu_custom_call.1} parent=5 // pred_check_branch
        %155 = sbr.rel (%p152) target = $region32
      $region31: #{tpu_custom_call.1} parent=5 // pred_region
        %s156 = ssub.s32 %s13, 1
        // Predicated region
        $region33: #{tpu_custom_call.1} parent=31 // pred_check
          %p157 = pneg %p60
        $region34: #{tpu_custom_call.1} parent=31 // pred_check_branch
          %159 = sbr.rel (%p157) target = $region36
        $region35: #{tpu_custom_call.1} parent=31 // pred_region
          %160 = dma.done [#allocation3], 3456
        $region36: #{tpu_custom_call.1} parent=31 // pred_fallthru
          _
        %p161 = scmp.lt.s32.totalorder %s18, 1
        %s162 = scalar_select %p161, %s18, 1
        %s163 = smul.addr %s162, 3
        %s164 = smul.addr %s163, 8
        %s165 = scalar_lea.vmem %s0, %s164
        %p166 = pneg %p39
        %p167 = pneg %p36
        %p168 = pneg %p60
        %p169 = pneg %p57
        %p170 = pneg %p81
        %p171 = pneg %p78
        %p172 = pneg %p107
        %p173 = pneg %p104
        %s174 = sand.u32 %s94, 1
        %s175 = scalar_lea.sflag [#allocation4], %s174
        %s176 = sand.u32 %s94, 1
        %s177 = smul.addr %s176, 16
        %s178 = scalar_lea.vmem [#allocation5], %s177
        %p179 = scmp.lt.s32.totalorder %s18, 1
        %s180 = scalar_select %p179, %s18, 1
        %s181 = smul.addr %s180, 3
        %s182 = smul.addr %s181, 8
        %s183 = scalar_lea.vmem %s0, %s182
        %v184 = vld [vmem:[%s183] sm:$0xff]
        %v185 = vld [vmem:[%s183 + $0x8] sm:$0xff]
        %v186 = vld [vmem:[%s183 + $0x10] sm:$0x3]
        %v187 = vld [vmem:[#allocation2] sm:$0xff]
        %v188 = vld [vmem:[#allocation2 + $0x8] sm:$0xff]
        %v189 = vld [vmem:[#allocation2 + $0x10] sm:$0xff]
        %v190 = vld [vmem:[#allocation2 + $0x18] sm:$0xff]
        %v191 = vld [vmem:[#allocation2 + $0x20] sm:$0xff]
        %v192 = vld [vmem:[#allocation2 + $0x28] sm:$0xff]
        %v193 = vld [vmem:[#allocation2 + $0x30] sm:$0xff]
        %v194 = vld [vmem:[#allocation2 + $0x38] sm:$0xff]
        %v195 = vld [vmem:[#allocation2 + $0x40] sm:$0xff]
        %s196 = scalar_lea.vmem [#allocation2], 72
        %v197 = vld [vmem:[%s196] sm:$0xff]
        %v198 = vld [vmem:[%s196 + $0x8] sm:$0xff]
        %v199 = vld [vmem:[%s196 + $0x10] sm:$0xff]
        %v200 = vld [vmem:[%s196 + $0x18] sm:$0xff]
        %v201 = vld [vmem:[%s196 + $0x20] sm:$0xff]
        %v202 = vld [vmem:[%s196 + $0x28] sm:$0xff]
        %v203 = vld [vmem:[%s196 + $0x30] sm:$0xff]
        %v204 = vld [vmem:[%s196 + $0x38] sm:$0xff]
        %v205 = vld [vmem:[%s196 + $0x40] sm:$0xff]
        %vm209 = vcmask 1046528
        %v210 = vrot.slane %v184, 1
        %v211 = vrot.slane %v185, 1
        %v212 = vsel %vm209, %v210, %v211
        %v213 = vrot.slane %v186, 1
        %v214 = vsel %vm209, %v211, %v213
        %vm215 = vcmask 588800
        %v216 = vsel %vm215, %v212, 0
        %v218 = vsel %vm215, %v214, 0
        %220 = vmatprep.subr.mxu0 0.0
        %221 = vmatpush1.msra.mxu0 0.0
        %222 = vmatprep.subr.mxu0 0.0
        %223 = vmatpush1.msra.mxu0 0.0
        %224 = vmatprep.subr.mxu0 0.0
        %225 = vmatpush1.msra.mxu0 0.0
        %226 = vmatprep.subr.mxu0 0.0
        %227 = vmatpush1.msra.mxu0 0.0
        %228 = vmatprep.subr.mxu0 0.0
        %229 = vmatpush1.msra.mxu0 0.0
        %230 = vmatprep.subr.mxu0 0.0
        %231 = vmatpush1.msra.mxu0 0.0
        %232 = vmatprep.subr.mxu0 0.0
        %233 = vmatpush1.msra.mxu0 0.0
        %234 = vmatprep.subr.mxu0 0.0
        %235 = vmatpush1.msra.mxu0 %v205
        %236 = vmatprep.subr.mxu0 0.0
        %237 = vmatpush1.msra.mxu0 %v204
        %238 = vmatprep.subr.mxu0 0.0
        %239 = vmatpush1.msra.mxu0 %v203
        %240 = vmatprep.subr.mxu0 0.0
        %241 = vmatpush1.msra.mxu0 %v202
        %242 = vmatprep.subr.mxu0 0.0
        %243 = vmatpush1.msra.mxu0 %v201
        %244 = vmatprep.subr.mxu0 0.0
        %245 = vmatpush1.msra.mxu0 %v200
        %246 = vmatprep.subr.mxu0 0.0
        %247 = vmatpush1.msra.mxu0 %v199
        %248 = vmatprep.subr.mxu0 0.0
        %249 = vmatpush1.msra.mxu0 %v198
        %250 = vmatprep.subr.mxu0 0.0
        %251 = vmatpush1.msra.mxu0 %v197
        %252 = vmatprep.subr.mxu0 0.0
        %253 = vmatpush2.msra.mxu0 0.0
        %254 = vmatprep.subr.mxu0 0.0
        %255 = vmatpush2.msra.mxu0 0.0
        %256 = vmatprep.subr.mxu0 0.0
        %257 = vmatpush2.msra.mxu0 0.0
        %258 = vmatprep.subr.mxu0 0.0
        %259 = vmatpush2.msra.mxu0 0.0
        %260 = vmatprep.subr.mxu0 0.0
        %261 = vmatpush2.msra.mxu0 0.0
        %262 = vmatprep.subr.mxu0 0.0
        %263 = vmatpush2.msra.mxu0 0.0
        %264 = vmatprep.subr.mxu0 0.0
        %265 = vmatpush2.msra.mxu0 0.0
        %266 = vmatprep.subr.mxu0 0.0
        %267 = vmatpush2.msra.mxu0 0.0
        %268 = vmatprep.subr.mxu0 0.0
        %269 = vmatpush2.msra.mxu0 0.0
        %270 = vmatprep.subr.mxu0 0.0
        %271 = vmatpush2.msra.mxu0 0.0
        %272 = vmatprep.subr.mxu0 0.0
        %273 = vmatpush2.msra.mxu0 0.0
        %274 = vmatprep.subr.mxu0 0.0
        %275 = vmatpush2.msra.mxu0 0.0
        %276 = vmatprep.subr.mxu0 0.0
        %277 = vmatpush2.msra.mxu0 0.0
        %278 = vmatprep.subr.mxu0 0.0
        %279 = vmatpush2.msra.mxu0 0.0
        %280 = vmatprep.subr.mxu0 0.0
        %281 = vmatpush2.msra.mxu0 0.0
        %282 = vmatprep.subr.mxu0 0.0
        %283 = vmatpush2.msra.mxu0 0.0
        %284 = vmatprep.mubr.f32.mxu0 0.0
        %285 = vmatmul.mubr.f32.gmra.mxu0 %v216
        %v286 = vpop.f32.mrf.mxu0
        %v287 = vadd.f32 0.0, %v286
        %v288 = vpop.f32.mrf.mxu0
        %289 = vmatprep.mubr.f32.mxu0 0.0
        %290 = vmatmul.mubr.f32.gmra.mxu0 %v218
        %v291 = vpop.f32.mrf.mxu0
        %v292 = vadd.f32 0.0, %v291
        %v293 = vpop.f32.mrf.mxu0
        %294 = vdwg.mxu0
        %v295 = vsel %vm215, %v184, 0
        %v297 = vsel %vm215, %v185, 0
        %299 = vmatprep.subr.mxu0 0.0
        %300 = vmatpush1.msra.mxu0 0.0
        %301 = vmatprep.subr.mxu0 0.0
        %302 = vmatpush1.msra.mxu0 0.0
        %303 = vmatprep.subr.mxu0 0.0
        %304 = vmatpush1.msra.mxu0 0.0
        %305 = vmatprep.subr.mxu0 0.0
        %306 = vmatpush1.msra.mxu0 0.0
        %307 = vmatprep.subr.mxu0 0.0
        %308 = vmatpush1.msra.mxu0 0.0
        %309 = vmatprep.subr.mxu0 0.0
        %310 = vmatpush1.msra.mxu0 0.0
        %311 = vmatprep.subr.mxu0 0.0
        %312 = vmatpush1.msra.mxu0 0.0
        %313 = vmatprep.subr.mxu0 0.0
        %314 = vmatpush1.msra.mxu0 %v195
        %315 = vmatprep.subr.mxu0 0.0
        %316 = vmatpush1.msra.mxu0 %v194
        %317 = vmatprep.subr.mxu0 0.0
        %318 = vmatpush1.msra.mxu0 %v193
        %319 = vmatprep.subr.mxu0 0.0
        %320 = vmatpush1.msra.mxu0 %v192
        %321 = vmatprep.subr.mxu0 0.0
        %322 = vmatpush1.msra.mxu0 %v191
        %323 = vmatprep.subr.mxu0 0.0
        %324 = vmatpush1.msra.mxu0 %v190
        %325 = vmatprep.subr.mxu0 0.0
        %326 = vmatpush1.msra.mxu0 %v189
        %327 = vmatprep.subr.mxu0 0.0
        %328 = vmatpush1.msra.mxu0 %v188
        %329 = vmatprep.subr.mxu0 0.0
        %330 = vmatpush1.msra.mxu0 %v187
        %331 = vmatprep.subr.mxu0 0.0
        %332 = vmatpush2.msra.mxu0 0.0
        %333 = vmatprep.subr.mxu0 0.0
        %334 = vmatpush2.msra.mxu0 0.0
        %335 = vmatprep.subr.mxu0 0.0
        %336 = vmatpush2.msra.mxu0 0.0
        %337 = vmatprep.subr.mxu0 0.0
        %338 = vmatpush2.msra.mxu0 0.0
        %339 = vmatprep.subr.mxu0 0.0
        %340 = vmatpush2.msra.mxu0 0.0
        %341 = vmatprep.subr.mxu0 0.0
        %342 = vmatpush2.msra.mxu0 0.0
        %343 = vmatprep.subr.mxu0 0.0
        %344 = vmatpush2.msra.mxu0 0.0
        %345 = vmatprep.subr.mxu0 0.0
        %346 = vmatpush2.msra.mxu0 0.0
        %347 = vmatprep.subr.mxu0 0.0
        %348 = vmatpush2.msra.mxu0 0.0
        %349 = vmatprep.subr.mxu0 0.0
        %350 = vmatpush2.msra.mxu0 0.0
        %351 = vmatprep.subr.mxu0 0.0
        %352 = vmatpush2.msra.mxu0 0.0
        %353 = vmatprep.subr.mxu0 0.0
        %354 = vmatpush2.msra.mxu0 0.0
        %355 = vmatprep.subr.mxu0 0.0
        %356 = vmatpush2.msra.mxu0 0.0
        %357 = vmatprep.subr.mxu0 0.0
        %358 = vmatpush2.msra.mxu0 0.0
        %359 = vmatprep.subr.mxu0 0.0
        %360 = vmatpush2.msra.mxu0 0.0
        %361 = vmatprep.subr.mxu0 0.0
        %362 = vmatpush2.msra.mxu0 0.0
        %363 = vmatprep.mubr.f32.mxu0 0.0
        %364 = vmatmul.mubr.f32.gmra.mxu0 %v295
        %v365 = vpop.f32.mrf.mxu0
        %v366 = vadd.f32 %v287, %v365
        %v367 = vpop.f32.mrf.mxu0
        %368 = vmatprep.mubr.f32.mxu0 0.0
        %369 = vmatmul.mubr.f32.gmra.mxu0 %v297
        %v370 = vpop.f32.mrf.mxu0
        %v371 = vadd.f32 %v292, %v370
        %v372 = vpop.f32.mrf.mxu0
        %373 = vdwg.mxu0
        %s374 = scalar_lea.vmem [#allocation2], 144
        %v375 = vld [vmem:[%s374] sm:$0xff]
        %v376 = vld [vmem:[%s374 + $0x8] sm:$0xff]
        %v377 = vld [vmem:[%s374 + $0x10] sm:$0xff]
        %v378 = vld [vmem:[%s374 + $0x18] sm:$0xff]
        %v379 = vld [vmem:[%s374 + $0x20] sm:$0xff]
        %v380 = vld [vmem:[%s374 + $0x28] sm:$0xff]
        %v381 = vld [vmem:[%s374 + $0x30] sm:$0xff]
        %v382 = vld [vmem:[%s374 + $0x38] sm:$0xff]
        %v383 = vld [vmem:[%s374 + $0x40] sm:$0xff]
        %vm384 = vcmask 1045504
        %v385 = vrot.slane %v184, 2
        %v386 = vrot.slane %v185, 2
        %v387 = vsel %vm384, %v385, %v386
        %v388 = vrot.slane %v186, 2
        %v389 = vsel %vm384, %v386, %v388
        %v390 = vsel %vm215, %v387, 0
        %v392 = vsel %vm215, %v389, 0
        %394 = vmatprep.subr.mxu0 0.0
        %395 = vmatpush1.msra.mxu0 0.0
        %396 = vmatprep.subr.mxu0 0.0
        %397 = vmatpush1.msra.mxu0 0.0
        %398 = vmatprep.subr.mxu0 0.0
        %399 = vmatpush1.msra.mxu0 0.0
        %400 = vmatprep.subr.mxu0 0.0
        %401 = vmatpush1.msra.mxu0 0.0
        %402 = vmatprep.subr.mxu0 0.0
        %403 = vmatpush1.msra.mxu0 0.0
        %404 = vmatprep.subr.mxu0 0.0
        %405 = vmatpush1.msra.mxu0 0.0
        %406 = vmatprep.subr.mxu0 0.0
        %407 = vmatpush1.msra.mxu0 0.0
        %408 = vmatprep.subr.mxu0 0.0
        %409 = vmatpush1.msra.mxu0 %v383
        %410 = vmatprep.subr.mxu0 0.0
        %411 = vmatpush1.msra.mxu0 %v382
        %412 = vmatprep.subr.mxu0 0.0
        %413 = vmatpush1.msra.mxu0 %v381
        %414 = vmatprep.subr.mxu0 0.0
        %415 = vmatpush1.msra.mxu0 %v380
        %416 = vmatprep.subr.mxu0 0.0
        %417 = vmatpush1.msra.mxu0 %v379
        %418 = vmatprep.subr.mxu0 0.0
        %419 = vmatpush1.msra.mxu0 %v378
        %420 = vmatprep.subr.mxu0 0.0
        %421 = vmatpush1.msra.mxu0 %v377
        %422 = vmatprep.subr.mxu0 0.0
        %423 = vmatpush1.msra.mxu0 %v376
        %424 = vmatprep.subr.mxu0 0.0
        %425 = vmatpush1.msra.mxu0 %v375
        %426 = vmatprep.subr.mxu0 0.0
        %427 = vmatpush2.msra.mxu0 0.0
        %428 = vmatprep.subr.mxu0 0.0
        %429 = vmatpush2.msra.mxu0 0.0
        %430 = vmatprep.subr.mxu0 0.0
        %431 = vmatpush2.msra.mxu0 0.0
        %432 = vmatprep.subr.mxu0 0.0
        %433 = vmatpush2.msra.mxu0 0.0
        %434 = vmatprep.subr.mxu0 0.0
        %435 = vmatpush2.msra.mxu0 0.0
        %436 = vmatprep.subr.mxu0 0.0
        %437 = vmatpush2.msra.mxu0 0.0
        %438 = vmatprep.subr.mxu0 0.0
        %439 = vmatpush2.msra.mxu0 0.0
        %440 = vmatprep.subr.mxu0 0.0
        %441 = vmatpush2.msra.mxu0 0.0
        %442 = vmatprep.subr.mxu0 0.0
        %443 = vmatpush2.msra.mxu0 0.0
        %444 = vmatprep.subr.mxu0 0.0
        %445 = vmatpush2.msra.mxu0 0.0
        %446 = vmatprep.subr.mxu0 0.0
        %447 = vmatpush2.msra.mxu0 0.0
        %448 = vmatprep.subr.mxu0 0.0
        %449 = vmatpush2.msra.mxu0 0.0
        %450 = vmatprep.subr.mxu0 0.0
        %451 = vmatpush2.msra.mxu0 0.0
        %452 = vmatprep.subr.mxu0 0.0
        %453 = vmatpush2.msra.mxu0 0.0
        %454 = vmatprep.subr.mxu0 0.0
        %455 = vmatpush2.msra.mxu0 0.0
        %456 = vmatprep.subr.mxu0 0.0
        %457 = vmatpush2.msra.mxu0 0.0
        %458 = vmatprep.mubr.f32.mxu0 0.0
        %459 = vmatmul.mubr.f32.gmra.mxu0 %v390
        %v460 = vpop.f32.mrf.mxu0
        %v461 = vadd.f32 0.0, %v460
        %v462 = vpop.f32.mrf.mxu0
        %463 = vmatprep.mubr.f32.mxu0 0.0
        %464 = vmatmul.mubr.f32.gmra.mxu0 %v392
        %v465 = vpop.f32.mrf.mxu0
        %v466 = vadd.f32 0.0, %v465
        %v467 = vpop.f32.mrf.mxu0
        %468 = vdwg.mxu0
        %v469 = vadd.f32 %v366, %v461
        %v470 = vadd.f32 %v371, %v466
        %v471 = vld [vmem:[%s2] sm:$0x1]
        %v473 = vlaneseq
        %v474 = vshrl.u32 %v473, 7
        %v475 = vsub.s32 0, %v474
        %v476 = vrot.slane %v471, %v475
        %v478 = vadd.f32 %v469, %v476
        %v479 = vadd.f32 %v470, %v476
        %480 = vst [vmem:[%s178] sm:$0xff] %v478
        %481 = vst [vmem:[%s178 + $0x8] sm:$0xff] %v479
        %s482 = sand.u32 %s94, 1
        %s483 = scalar_lea.sflag [#allocation4], %s482
        %s484 = sand.u32 %s94, 1
        %s485 = smul.addr %s484, 16
        %s486 = scalar_lea.vmem [#allocation5], %s485
        // Predicated region
        $region37: #{tpu_custom_call.1} parent=31 // pred_check
          %p487 = pneg %p104
        $region38: #{tpu_custom_call.1} parent=31 // pred_check_branch
          %489 = sbr.rel (%p487) target = $region40
        $region39: #{tpu_custom_call.1} parent=31 // pred_region
          %s491 = ssub.s32 256, 256
          %492 = vsyncadd %s483, %s491
          %s493 = smul.addr %s18, 2
          %s494 = smul.addr %s493, 128
          %s495 = scalar_lea.hbm %s3, %s494
          %s496 = sshll.u32 %s486, 4
          %s497 = int_to_ptr.vmem [resolvable:$true] %s496
          %502 = dma.vmem_to_hbm [thread:$0]  %s497, 256, %s495, %s483, 128, 128, 8
        $region40: #{tpu_custom_call.1} parent=31 // pred_fallthru
          _
      $region32: #{tpu_custom_call.1} parent=5 // pred_fallthru
        _
      %p503 = scmp.le.s32.totalorder 2, %s13
      // Predicated region
      $region41: #{tpu_custom_call.1} parent=5 // pred_check
        %p504 = pneg %p503
      $region42: #{tpu_custom_call.1} parent=5 // pred_check_branch
        %506 = sbr.rel (%p504) target = $region44
      $region43: #{tpu_custom_call.1} parent=5 // pred_region
        %s507 = ssub.s32 %s13, 2
        // Predicated region
        $region45: #{tpu_custom_call.1} parent=43 // pred_check
          %p508 = pneg %p110
        $region46: #{tpu_custom_call.1} parent=43 // pred_check_branch
          %510 = sbr.rel (%p508) target = $region48
        $region47: #{tpu_custom_call.1} parent=43 // pred_region
          %s511 = sand.u32 %s95, 1
          %s512 = scalar_lea.sflag [#allocation4], %s511
          %s513 = sand.u32 %s95, 1
          %s514 = smul.addr %s513, 16
          %s515 = scalar_lea.vmem [#allocation5], %s514
          %516 = dma.done %s512, 256
        $region48: #{tpu_custom_call.1} parent=43 // pred_fallthru
          _
      $region44: #{tpu_custom_call.1} parent=5 // pred_fallthru
        _
    $region6: #{tpu_custom_call.1} parent=1 // loop_footer
      %s17 = sadd.s32 1, %s13
    $region7: #{tpu_custom_call.1} parent=1 // loop_footer_branch
      %12 = sbr.rel target = $region3
    $region8: #{tpu_custom_call.1} parent=1 // loop_exit
      _
    %517 = vsyncpa [#allocation3], 1
    %s518 = scalar_lea.sflag [#allocation3], 1
    %519 = vsyncpa %s518, 1
    %520 = vsyncpa [#allocation4], 1
    %s521 = scalar_lea.sflag [#allocation4], 1
    %522 = vsyncpa %s521, 1

</llo_original>
